<compile_context>
chip_gen: v6e
topology: v6e:2x2x1
jax: 0.10.0
libtpu: 0.0.40
codegen_flags: <defaults>
</compile_context>

<pallas_src>
from math import sqrt

import jax
import jax.numpy as jnp
from jax import lax
from jax.experimental import pallas as pl
from jax.experimental.pallas import tpu as pltpu


def _pick_tile(dim, target, align):
    """Largest tile <= target that divides `dim` and is a multiple of `align`;
    falls back to the full dim (full-extent blocks are always legal)."""
    if dim <= target:
        return dim
    t = (min(target, dim) // align) * align
    while t >= align:
        if dim % t == 0:
            return t
        t -= align
    return dim


_VMEM_LIMIT = 48 * 1024 * 1024  # <= 48 MiB: safe on v7x (64 MiB/TC) and below v5e/v6e caps.


# --------------------- Kernel 1: fused QKV projection ------------------------
def _qkv_kernel(x_ref, w_ref, b_ref, o_ref, acc_ref):
    # grid = (M/tm, 3*(H/tn), K/tk); K is the (last, "arbitrary") reduction axis.
    @pl.when(pl.program_id(2) == 0)
    def _():
        acc_ref[...] = jnp.zeros_like(acc_ref)

    acc_ref[...] += jnp.dot(x_ref[...], w_ref[0],
                            preferred_element_type=jnp.float32)

    @pl.when(pl.program_id(2) == pl.num_programs(2) - 1)
    def _():
        o_ref[0] = (acc_ref[...] + b_ref[0]).astype(o_ref.dtype)


def qkv_projection(x2d, w3, b3, *, tm=512, tn=512, tk=512):
    """x2d:(M,H) bf16, w3:(3,H,H) bf16 (scale pre-folded into w3[0]), b3:(3,1,H) f32
    -> stacked (3, M, H) in x2d.dtype.  One GEMM, x read from HBM once."""
    M, K = x2d.shape
    _, _, H = w3.shape
    tm = _pick_tile(M, tm, 8)       # sublane axis of x / out
    tn = _pick_tile(H, tn, 128)     # lane axis (divides H so N-tiles never straddle Q/K/V)
    tk = _pick_tile(K, tk, 128)
    n_per = H // tn
    grid = (M // tm, 3 * n_per, K // tk)

    itemsize = x2d.dtype.itemsize
    cost = pl.CostEstimate(
        flops=2 * M * 3 * H * K,
        transcendentals=0,
        bytes_accessed=(M * K + 3 * K * H + 3 * M * H) * itemsize + 3 * H * 4,
    )
    return pl.pallas_call(
        _qkv_kernel,
        out_shape=jax.ShapeDtypeStruct((3, M, H), x2d.dtype),
        grid=grid,
        in_specs=[
            pl.BlockSpec((tm, tk), lambda i, j, k: (i, k)),
            pl.BlockSpec((1, tk, tn), lambda i, j, k: (j // n_per, k, j % n_per)),
            pl.BlockSpec((1, 1, tn), lambda i, j, k: (j // n_per, 0, j % n_per)),
        ],
        out_specs=pl.BlockSpec((1, tm, tn),
                               lambda i, j, k: (j // n_per, i, j % n_per)),
        scratch_shapes=[pltpu.VMEM((tm, tn), jnp.float32)],
        compiler_params=pltpu.CompilerParams(
            dimension_semantics=("parallel", "parallel", "arbitrary"),
            vmem_limit_bytes=_VMEM_LIMIT),
        cost_estimate=cost,
    )(x2d, w3, b3)


# ------------------- Kernel 2: general tiled GEMM + bias ---------------------
def _linear_kernel(x_ref, w_ref, b_ref, o_ref, acc_ref):
    @pl.when(pl.program_id(2) == 0)
    def _():
        acc_ref[...] = jnp.zeros_like(acc_ref)

    acc_ref[...] += jnp.dot(x_ref[...], w_ref[...],
                            preferred_element_type=jnp.float32)

    @pl.when(pl.program_id(2) == pl.num_programs(2) - 1)
    def _():
        o_ref[...] = (acc_ref[...] + b_ref[...]).astype(o_ref.dtype)


def linear_tiled(x2d, w, b, *, tm=512, tn=512, tk=512):
    """y = x2d @ w + b with (tm, tn, tk) tiling, bf16 operands / f32 accumulation."""
    M, K = x2d.shape
    _, N = w.shape
    tm = _pick_tile(M, tm, 8)
    tn = _pick_tile(N, tn, 128)
    tk = _pick_tile(K, tk, 128)
    grid = (M // tm, N // tn, K // tk)

    itemsize = x2d.dtype.itemsize
    cost = pl.CostEstimate(
        flops=2 * M * N * K,
        transcendentals=0,
        bytes_accessed=(M * K + K * N + M * N) * itemsize + N * 4,
    )
    return pl.pallas_call(
        _linear_kernel,
        out_shape=jax.ShapeDtypeStruct((M, N), x2d.dtype),
        grid=grid,
        in_specs=[
            pl.BlockSpec((tm, tk), lambda i, j, k: (i, k)),
            pl.BlockSpec((tk, tn), lambda i, j, k: (k, j)),
            pl.BlockSpec((1, tn), lambda i, j, k: (0, j)),
        ],
        out_specs=pl.BlockSpec((tm, tn), lambda i, j, k: (i, j)),
        scratch_shapes=[pltpu.VMEM((tm, tn), jnp.float32)],
        compiler_params=pltpu.CompilerParams(
            dimension_semantics=("parallel", "parallel", "arbitrary"),
            vmem_limit_bytes=_VMEM_LIMIT),
        cost_estimate=cost,
    )(x2d, w, b.reshape(1, N))


# --------------------- Kernel 3: flash-style attention ------------------------
def _flash_attn_kernel(q_ref, k_ref, v_ref, o_ref, m_ref, l_ref, acc_ref):
    # grid = (B*nH, S/tq, S/tkv); kv is the (last, "arbitrary") reduction axis.
    ki = pl.program_id(2)

    @pl.when(ki == 0)
    def _():
        m_ref[...] = jnp.full_like(m_ref, -jnp.inf)
        l_ref[...] = jnp.zeros_like(l_ref)
        acc_ref[...] = jnp.zeros_like(acc_ref)

    q = q_ref[0, 0]     # (tq, dh) bf16; 1/sqrt(dh) already folded into Wq/bq
    k = k_ref[0, 0]     # (tkv, dh)
    v = v_ref[0, 0]     # (tkv, dh)

    # q @ k^T without materializing the transpose: contract axis 1 of both operands.
    s = lax.dot_general(q, k, (((1,), (1,)), ((), ())),
                        preferred_element_type=jnp.float32)          # (tq, tkv) f32

    # Softmax math kept in f32 (v5e has no bf16 VPU/EUP arithmetic).
    m_prev = m_ref[...]
    m_new = jnp.maximum(m_prev, jnp.max(s, axis=-1, keepdims=True))
    alpha = jnp.exp(m_prev - m_new)
    p = jnp.exp(s - m_new)                                           # unnormalized probs
    l_ref[...] = alpha * l_ref[...] + jnp.sum(p, axis=-1, keepdims=True)
    acc_ref[...] = alpha * acc_ref[...] + jnp.dot(
        p.astype(v.dtype), v, preferred_element_type=jnp.float32)
    m_ref[...] = m_new

    @pl.when(ki == pl.num_programs(2) - 1)
    def _():
        # Normalize once on the (tq, dh) accumulator via the EUP reciprocal slot.
        inv_l = pl.reciprocal(l_ref[...], approx=True)
        o_ref[0] = (acc_ref[...] * inv_l).astype(o_ref.dtype)


def flash_attention(qkv3, out_dtype, *, tq=512, tkv=256):
    """qkv3: stacked (3, B*nH, S, dh) heads-major Q/K/V (bf16).  Returns (B*nH, S, dh)."""
    _, BH, S, dh = qkv3.shape
    tq = _pick_tile(S, tq, 8)        # large tq amortizes K/V re-streaming from HBM
    tkv = _pick_tile(S, tkv, 128)    # 128-aligned K/N feeds for the MXU
    grid = (BH, S // tq, S // tkv)

    q_spec = pl.BlockSpec((1, 1, tq, dh), lambda b, qi, ki: (0, b, qi, 0))
    k_spec = pl.BlockSpec((1, 1, tkv, dh), lambda b, qi, ki: (1, b, ki, 0))
    v_spec = pl.BlockSpec((1, 1, tkv, dh), lambda b, qi, ki: (2, b, ki, 0))

    itemsize = qkv3.dtype.itemsize
    cost = pl.CostEstimate(
        flops=4 * BH * S * S * dh,
        transcendentals=BH * S * S,
        bytes_accessed=3 * BH * S * dh * itemsize
                       + BH * S * dh * jnp.dtype(out_dtype).itemsize,
    )
    # TODO(synk): for dh < 128 (e.g. dh=64), pack 2+ heads per output block so the
    # stored lane width is >=128 (avoids masked vst.msk partial stores, biggest on v5e).
    return pl.pallas_call(
        _flash_attn_kernel,
        out_shape=jax.ShapeDtypeStruct((BH, S, dh), out_dtype),
        grid=grid,
        in_specs=[q_spec, k_spec, v_spec],
        out_specs=pl.BlockSpec((1, tq, dh), lambda b, qi, ki: (b, qi, 0)),
        scratch_shapes=[
            pltpu.VMEM((tq, 1), jnp.float32),    # running max m
            pltpu.VMEM((tq, 1), jnp.float32),    # running denom l
            pltpu.VMEM((tq, dh), jnp.float32),   # output accumulator
        ],
        compiler_params=pltpu.CompilerParams(
            dimension_semantics=("parallel", "parallel", "arbitrary"),
            vmem_limit_bytes=_VMEM_LIMIT),
        cost_estimate=cost,
    )(qkv3, qkv3, qkv3)


# ------------------------------ Module wrapper -------------------------------
class SelfAttentionPallas:
    def __init__(self, hidden_size, num_attention_heads, dropout_prob=0.1,
                 key=None, compute_dtype=jnp.bfloat16):
        if hidden_size % num_attention_heads != 0:
            raise ValueError("hidden_size must be a multiple of num_attention_heads")
        self.num_heads = num_attention_heads
        self.head_dim = hidden_size // num_attention_heads
        self.hidden = hidden_size
        self.dropout_prob = dropout_prob          # eval-mode: identity
        self.compute_dtype = compute_dtype

        key = jax.random.PRNGKey(42) if key is None else key
        ks = jax.random.split(key, 6)
        bound = 1.0 / sqrt(hidden_size)
        init = lambda k, shp: jax.random.uniform(
            k, shp, dtype=jnp.float32, minval=-bound, maxval=bound)
        # Master params in f32, stored pre-transposed so y = x @ W + b
        # (PyTorch Linear computes x @ W^T + b).
        self.wq, self.bq = init(ks[0], (hidden_size, hidden_size)), init(ks[1], (hidden_size,))
        self.wk, self.bk = init(ks[2], (hidden_size, hidden_size)), init(ks[3], (hidden_size,))
        self.wv, self.bv = init(ks[4], (hidden_size, hidden_size)), init(ks[5], (hidden_size,))

        # Compute copies: 1/sqrt(dh) folded into the Q projection (zero runtime cost),
        # weights in bf16 for native-rate MXU and half the HBM bytes; biases stay f32.
        scale = 1.0 / sqrt(self.head_dim)
        self._wq = (self.wq * scale).astype(compute_dtype)
        self._wk = self.wk.astype(compute_dtype)
        self._wv = self.wv.astype(compute_dtype)
        self._bq = self.bq * scale
        self._bk = self.bk
        self._bv = self.bv
        # Stacked (3, H, H) / (3, 1, H) for the fused-QKV fast path.
        self._w3 = jnp.stack([self._wq, self._wk, self._wv], axis=0)
        self._b3 = jnp.stack([self._bq, self._bk, self._bv], axis=0)[:, None, :]

    def __call__(self, queries, keys, values):
        # queries/keys/values: (B, S, H)
        B, S, H = queries.shape
        nH, dh = self.num_heads, self.head_dim
        out_dtype = queries.dtype
        cd = self.compute_dtype

        if queries is keys and keys is values:
            # Self-attention fast path: one fused GEMM, x read from HBM once,
            # stacked (3, M, H) output (no post-hoc Q/K/V slice copies).
            x2d = queries.reshape(B * S, H).astype(cd)
            qkv3 = qkv_projection(x2d, self._w3, self._b3)
        else:
            # General (cross-attention-style) inputs: three tiled GEMMs, then stack.
            q2d = linear_tiled(queries.reshape(B * S, H).astype(cd), self._wq, self._bq)
            k2d = linear_tiled(keys.reshape(B * S, H).astype(cd), self._wk, self._bk)
            v2d = linear_tiled(values.reshape(B * S, H).astype(cd), self._wv, self._bv)
            qkv3 = jnp.stack([q2d, k2d, v2d], axis=0)

        # Heads-major layout for the attention kernel: (3, B*S, H) -> (3, B*nH, S, dh).
        # TODO(synk): when dh (or a packed head group) is a multiple of 128, emit this
        # layout directly from the projection out_specs and write the attention output
        # straight into (B, S, H) to drop these XLA transpose passes entirely.
        qkv3 = (qkv3.reshape(3, B, S, nH, dh)
                     .transpose(0, 1, 3, 2, 4)
                     .reshape(3, B * nH, S, dh))

        ctx = flash_attention(qkv3, out_dtype)                  # (B*nH, S, dh)
        ctx = ctx.reshape(B, nH, S, dh).transpose(0, 2, 1, 3).reshape(B, S, H)
        return ctx


# ----------------------------- Reference (JAX, f32) ---------------------------
def reference(mod, q_in, k_in, v_in):
    B, S, H = q_in.shape
    nH, dh = mod.num_heads, mod.head_dim
    q = q_in @ mod.wq + mod.bq
    k = k_in @ mod.wk + mod.bk
    v = v_in @ mod.wv + mod.bv
    split = lambda x: x.reshape(B, S, nH, dh).transpose(0, 2, 1, 3)
    qh, kh, vh = split(q), split(k), split(v)
    s = jnp.einsum("bhqd,bhkd->bhqk", qh, kh) / sqrt(dh)
    p = jax.nn.softmax(s, axis=-1)
    ctx = jnp.einsum("bhqk,bhkd->bhqd", p, vh)
    return ctx.transpose(0, 2, 1, 3).reshape(B, S, H)


if __name__ == "__main__":
    B, S, H, nH = 2, 8, 32, 4
    key = jax.random.PRNGKey(0)
    kq, kk, kv = jax.random.split(key, 3)
    queries = jax.random.normal(kq, (B, S, H), dtype=jnp.float32)
    keys_ = jax.random.normal(kk, (B, S, H), dtype=jnp.float32)
    values = jax.random.normal(kv, (B, S, H), dtype=jnp.float32)

    mod = SelfAttentionPallas(hidden_size=H, num_attention_heads=nH)

    # bf16 operands vs f32 reference -> relaxed (but still tight) tolerances.
    tol = dict(atol=3e-2, rtol=3e-2)

    # 1) General path (distinct q/k/v inputs) — three tiled projection GEMMs.
    out = jax.block_until_ready(mod(queries, keys_, values))
    ref = reference(mod, queries, keys_, values)
    assert out.shape == (B, S, H)
    assert jnp.allclose(out, ref, **tol), "mismatch (distinct q/k/v)"

    # 2) Self-attention fast path — fused QKV GEMM (x read once, stacked output).
    out2 = jax.block_until_ready(mod(queries, queries, queries))
    ref2 = reference(mod, queries, queries, queries)
    assert jnp.allclose(out2, ref2, **tol), "mismatch (fused QKV)"

    print("KERNEL_OK")
</pallas_src>

<mosaic_0001>
module attributes {stable_mosaic.version = 11 : i64} {
  func.func @_linear_kernel(%arg0: i32, %arg1: i32, %arg2: i32, %arg3: memref<16x32xbf16, #tpu.memory_space<vmem>>, %arg4: memref<32x32xbf16, #tpu.memory_space<vmem>>, %arg5: memref<1x32xf32, #tpu.memory_space<vmem>>, %arg6: memref<16x32xbf16, #tpu.memory_space<vmem>>, %arg7: memref<16x32xf32, #tpu.memory_space<vmem>>) attributes {dimension_semantics = [#tpu.dimension_semantics<parallel>, #tpu.dimension_semantics<parallel>, #tpu.dimension_semantics<arbitrary>], iteration_bounds = array<i64: 1, 1, 1>, scalar_prefetch = 0 : i64, scratch_operands = 1 : i64, tpu.core_type = #tpu.core_type<tc>, window_params = [{transform_indices = @transform_0, window_bounds = array<i64: 16, 32>}, {transform_indices = @transform_1, window_bounds = array<i64: 32, 32>}, {transform_indices = @transform_2, window_bounds = array<i64: 1, 32>}, {transform_indices = @transform_3, window_bounds = array<i64: 16, 32>}]} {
    %c0_i32 = arith.constant 0 : i32
    %0 = arith.cmpi eq, %arg2, %c0_i32 : i32
    %1 = arith.extui %0 : i1 to i32
    %c0_i32_0 = arith.constant 0 : i32
    %2 = arith.cmpi ne, %1, %c0_i32_0 : i32
    scf.if %2 {
      %cst_10 = arith.constant 0.000000e+00 : f32
      %12 = vector.broadcast %cst_10 : f32 to vector<16x32xf32>
      %c0_11 = arith.constant 0 : index
      %c0_12 = arith.constant 0 : index
      %13 = vector.load %arg7[%c0_11, %c0_12] : memref<16x32xf32, #tpu.memory_space<vmem>>, vector<16x32xf32>
      tpu.vector_store %arg7[%c0_11, %c0_12], %12 {strides = array<i32>} : memref<16x32xf32, #tpu.memory_space<vmem>>, vector<16x32xf32>,
    } else {
    }
    %c0 = arith.constant 0 : index
    %c0_1 = arith.constant 0 : index
    %3 = vector.load %arg7[%c0, %c0_1] : memref<16x32xf32, #tpu.memory_space<vmem>>, vector<16x32xf32>
    %c0_2 = arith.constant 0 : index
    %c0_3 = arith.constant 0 : index
    %4 = vector.load %arg3[%c0_2, %c0_3] : memref<16x32xbf16, #tpu.memory_space<vmem>>, vector<16x32xbf16>
    %c0_4 = arith.constant 0 : index
    %c0_5 = arith.constant 0 : index
    %5 = vector.load %arg4[%c0_4, %c0_5] : memref<32x32xbf16, #tpu.memory_space<vmem>>, vector<32x32xbf16>
    %cst = arith.constant dense<0.000000e+00> : vector<16x32xf32>
    %6 = tpu.matmul %4, %5, %cst {dimension_numbers = #tpu.dot_dimension_numbers<[1], [0], [0], [1], [0, 0, 1, 1], [], []>} : vector<16x32xbf16>, vector<32x32xbf16>, vector<16x32xf32> -> vector<16x32xf32>
    %7 = arith.addf %3, %6 : vector<16x32xf32>
    %c0_6 = arith.constant 0 : index
    %c0_7 = arith.constant 0 : index
    %8 = vector.load %arg7[%c0_6, %c0_7] : memref<16x32xf32, #tpu.memory_space<vmem>>, vector<16x32xf32>
    tpu.vector_store %arg7[%c0_6, %c0_7], %7 {strides = array<i32>} : memref<16x32xf32, #tpu.memory_space<vmem>>, vector<16x32xf32>,
    %c0_i32_8 = arith.constant 0 : i32
    %9 = arith.cmpi eq, %arg2, %c0_i32_8 : i32
    %10 = arith.extui %9 : i1 to i32
    %c0_i32_9 = arith.constant 0 : i32
    %11 = arith.cmpi ne, %10, %c0_i32_9 : i32
    scf.if %11 {
      %c0_10 = arith.constant 0 : index
      %c0_11 = arith.constant 0 : index
      %12 = vector.load %arg7[%c0_10, %c0_11] : memref<16x32xf32, #tpu.memory_space<vmem>>, vector<16x32xf32>
      %c0_12 = arith.constant 0 : index
      %c0_13 = arith.constant 0 : index
      %13 = vector.load %arg5[%c0_12, %c0_13] : memref<1x32xf32, #tpu.memory_space<vmem>>, vector<1x32xf32>
      %14 = vector.broadcast %13 : vector<1x32xf32> to vector<16x32xf32>
      %15 = arith.addf %12, %14 : vector<16x32xf32>
      %16 = arith.truncf %15 : vector<16x32xf32> to vector<16x32xbf16>
      %c0_14 = arith.constant 0 : index
      %c0_15 = arith.constant 0 : index
      %17 = vector.load %arg6[%c0_14, %c0_15] : memref<16x32xbf16, #tpu.memory_space<vmem>>, vector<16x32xbf16>
      tpu.vector_store %arg6[%c0_14, %c0_15], %16 {strides = array<i32>} : memref<16x32xbf16, #tpu.memory_space<vmem>>, vector<16x32xbf16>,
    } else {
    }
    return
  }
  func.func @transform_0(%arg0: i32, %arg1: i32, %arg2: i32) -> (i32, i32) {
    %c0_i32 = arith.constant 0 : i32
    return %arg0, %arg2 : i32, i32
  }
  func.func @transform_1(%arg0: i32, %arg1: i32, %arg2: i32) -> (i32, i32) {
    %c0_i32 = arith.constant 0 : i32
    return %arg2, %arg1 : i32, i32
  }
  func.func @transform_2(%arg0: i32, %arg1: i32, %arg2: i32) -> (i32, i32) {
    %c0_i32 = arith.constant 0 : i32
    %c0_i32_0 = arith.constant 0 : i32
    return %c0_i32, %arg1 : i32, i32
  }
  func.func @transform_3(%arg0: i32, %arg1: i32, %arg2: i32) -> (i32, i32) {
    %c0_i32 = arith.constant 0 : i32
    return %arg0, %arg1 : i32, i32
  }
}

</mosaic_0001>

<llo_original>
// kernel: tpu_custom_call.1
$region0: #{tpu_custom_call.1}
  #allocation0 [shape = 'u32[]', space=smem, size = 0x4, offset = 0x4, fixed_abs, tag = 'smem constant byte address 0x4 - core index']
  #allocation1 [shape = 'u32[144,128]{1,0:T(1,128)}', space=vmem, size = 0x12000, scoped, tag = 'internal scratch']
  #allocation2 [shape = 'f32[16,32]{1,0:T(8,128)}', space=vmem, size = 0x2000, scoped, tag = 'scratch operand']
  %s0 = inlined_call_operand.hbm [shape: bf16[16,32], index: 0, kind: input, shape index: {}]
  %s1 = inlined_call_operand.hbm [shape: bf16[32,32], index: 1, kind: input, shape index: {}]
  %s2 = inlined_call_operand.vmem [shape: f32[1,32], index: 2, kind: input, shape index: {}]
  %s3 = inlined_call_operand.hbm [shape: bf16[16,32], index: 3, kind: output, shape index: {}]
  %s4 = sld [smem:[#allocation0]]
  $region38: #{tpu_custom_call.1} parent=0
    _
  %s6 = ssub.s32 1, %s4
  %s7 = scalar_select 0, %s6, %s4
  $region1: #{tpu_custom_call.1} parent=0
    #allocation3 [shape = 'u8[4096]{0}', space=vmem, size = 0x1000, scoped, tag = 'input window, operand 0, single buffered']
    #allocation4 [shape = 's32[1]{0}', space=sflag, size = 0x4, scoped, tag = 'scoped memory for tpu_custom_call.1']
    #allocation5 [shape = 's32[1]{0}', space=sflag, size = 0x4, scoped, tag = 'scoped memory for tpu_custom_call.1']
    #allocation6 [shape = 'u8[8192]{0}', space=vmem, size = 0x2000, scoped, tag = 'input window, operand 1, single buffered']
    #allocation7 [shape = 's32[1]{0}', space=sflag, size = 0x4, scoped, tag = 'scoped memory for tpu_custom_call.1']
    #allocation8 [shape = 'u8[4096]{0}', space=vmem, size = 0x1000, scoped, tag = 'output window, operand 0, single buffered']
    %8 = vsyncpa [#allocation4], 0
    %9 = vsyncpa [#allocation7], 0
    %10 = vsyncpa [#allocation5], 0
    // Predicated region
    $region2: #{tpu_custom_call.1} parent=1 // pred_check
      _
    $region3: #{tpu_custom_call.1} parent=1 // pred_check_branch
      %12 = sbr.rel (0) target = $region5
    $region4: #{tpu_custom_call.1} parent=1 // pred_region
      %s14 = ssub.s32 128, 128
      %15 = vsyncadd [#allocation4], %s14
      %s16 = sshll.u32 [#allocation3], 4
      %s17 = int_to_ptr.vmem [resolvable:$true] %s16
      %22 = dma.hbm_to_vmem [thread:$0]  %s0, 128, %s17, [#allocation4], 64, 64, 4
    $region5: #{tpu_custom_call.1} parent=1 // pred_fallthru
      _
    // Predicated region
    $region6: #{tpu_custom_call.1} parent=1 // pred_check
      _
    $region7: #{tpu_custom_call.1} parent=1 // pred_check_branch
      %24 = sbr.rel (0) target = $region9
    $region8: #{tpu_custom_call.1} parent=1 // pred_region
      %s26 = ssub.s32 256, 256
      %27 = vsyncadd [#allocation7], %s26
      %s28 = sshll.u32 [#allocation6], 4
      %s29 = int_to_ptr.vmem [resolvable:$true] %s28
      %34 = dma.hbm_to_vmem [thread:$0]  %s1, 256, %s29, [#allocation7], 64, 64, 4
    $region9: #{tpu_custom_call.1} parent=1 // pred_fallthru
      _
    // Predicated region
    $region10: #{tpu_custom_call.1} parent=1 // pred_check
      _
    $region11: #{tpu_custom_call.1} parent=1 // pred_check_branch
      %36 = sbr.rel (0) target = $region13
    $region12: #{tpu_custom_call.1} parent=1 // pred_region
      _
    $region13: #{tpu_custom_call.1} parent=1 // pred_fallthru
      _
    // Predicated region
    $region14: #{tpu_custom_call.1} parent=1 // pred_check
      _
    $region15: #{tpu_custom_call.1} parent=1 // pred_check_branch
      %38 = sbr.rel (0) target = $region17
    $region16: #{tpu_custom_call.1} parent=1 // pred_region
      %39 = dma.done [#allocation4], 128
    $region17: #{tpu_custom_call.1} parent=1 // pred_fallthru
      _
    // Predicated region
    $region18: #{tpu_custom_call.1} parent=1 // pred_check
      _
    $region19: #{tpu_custom_call.1} parent=1 // pred_check_branch
      %41 = sbr.rel (0) target = $region21
    $region20: #{tpu_custom_call.1} parent=1 // pred_region
      %42 = dma.done [#allocation7], 256
    $region21: #{tpu_custom_call.1} parent=1 // pred_fallthru
      _
    %p44 = scmp.eq.s32.totalorder 0, 0
    // Predicated region
    $region22: #{tpu_custom_call.1} parent=1 // pred_check
      %p45 = pneg %p44
    $region23: #{tpu_custom_call.1} parent=1 // pred_check_branch
      %47 = sbr.rel (%p45) target = $region25
    $region24: #{tpu_custom_call.1} parent=1 // pred_region
      %vm48 = vcmask 261120
      %49 = vst.msk [vmem:[#allocation2] sm:$0xff] %vm48, 0.0
      %50 = vst.msk [vmem:[#allocation2 + $0x8] sm:$0xff] %vm48, 0.0
    $region25: #{tpu_custom_call.1} parent=1 // pred_fallthru
      _
    %v51 = vld [vmem:[#allocation2] sm:$0xff]
    %v52 = vld [vmem:[#allocation2 + $0x8] sm:$0xff]
    %v53 = vld [vmem:[#allocation3] sm:$0xf]
    %v54 = vld [vmem:[#allocation3 + $0x4] sm:$0xf]
    %v55 = vld [vmem:[#allocation6] sm:$0xf]
    %v56 = vld [vmem:[#allocation6 + $0x4] sm:$0xf]
    %v57 = vld [vmem:[#allocation6 + $0x8] sm:$0xf]
    %v58 = vld [vmem:[#allocation6 + $0xc] sm:$0xf]
    %v61 = vunpack.c.l.b16 %v53
    %v62 = vunpack.c.l.b16 %v54
    %v63 = vpack.c.b16 %v62, %v61
    %v68 = vunpack.c.l.b16 %v55
    %v69 = vunpack.c.l.b16 %v56
    %v70 = vunpack.c.l.b16 %v57
    %v71 = vunpack.c.l.b16 %v58
    %v72 = vpack.c.b16 %v69, %v68
    %v73 = vpack.c.b16 %v71, %v70
    %vm76 = vcmask 261120
    %v78 = vsel %vm76, %v63, 0
    %80 = vmatprep.subr.bf16.mxu0 0
    %81 = vmatpush1.bf16.msra.mxu0 0
    %82 = vmatprep.subr.bf16.mxu0 0
    %83 = vmatpush1.bf16.msra.mxu0 0
    %84 = vmatprep.subr.bf16.mxu0 0
    %85 = vmatpush1.bf16.msra.mxu0 0
    %86 = vmatprep.subr.bf16.mxu0 0
    %87 = vmatpush1.bf16.msra.mxu0 0
    %88 = vmatprep.subr.bf16.mxu0 0
    %89 = vmatpush1.bf16.msra.mxu0 0
    %90 = vmatprep.subr.bf16.mxu0 0
    %91 = vmatpush1.bf16.msra.mxu0 0
    %92 = vmatprep.subr.bf16.mxu0 0
    %93 = vmatpush1.bf16.msra.mxu0 %v73
    %94 = vmatprep.subr.bf16.mxu0 0
    %95 = vmatpush1.bf16.msra.mxu0 %v72
    %96 = vmatprep.subr.bf16.mxu0 0
    %97 = vmatpush2.bf16.msra.mxu0 0
    %98 = vmatprep.subr.bf16.mxu0 0
    %99 = vmatpush2.bf16.msra.mxu0 0
    %100 = vmatprep.subr.bf16.mxu0 0
    %101 = vmatpush2.bf16.msra.mxu0 0
    %102 = vmatprep.subr.bf16.mxu0 0
    %103 = vmatpush2.bf16.msra.mxu0 0
    %104 = vmatprep.subr.bf16.mxu0 0
    %105 = vmatpush2.bf16.msra.mxu0 0
    %106 = vmatprep.subr.bf16.mxu0 0
    %107 = vmatpush2.bf16.msra.mxu0 0
    %108 = vmatprep.subr.bf16.mxu0 0
    %109 = vmatpush2.bf16.msra.mxu0 0
    %110 = vmatprep.subr.bf16.mxu0 0
    %111 = vmatpush2.bf16.msra.mxu0 0
    %112 = vmatprep.mubr.bf16.mxu0 0
    %113 = vmatmul.mubr.bf16.gmra.mxu0 %v78
    %v114 = vpop.f32.mrf.mxu0
    %v115 = vadd.f32 0.0, %v114
    %v116 = vpop.f32.mrf.mxu0
    %v117 = vpop.f32.mrf.mxu0
    %v118 = vadd.f32 0.0, %v117
    %v119 = vpop.f32.mrf.mxu0
    %120 = vdwg.mxu0
    %v121 = vadd.f32 %v51, %v115
    %v122 = vadd.f32 %v52, %v118
    %123 = vst.msk [vmem:[#allocation2] sm:$0xff] %vm76, %v121
    %124 = vst.msk [vmem:[#allocation2 + $0x8] sm:$0xff] %vm76, %v122
    // Predicated region
    $region26: #{tpu_custom_call.1} parent=1 // pred_check
      %p125 = pneg %p44
    $region27: #{tpu_custom_call.1} parent=1 // pred_check_branch
      %127 = sbr.rel (%p125) target = $region29
    $region28: #{tpu_custom_call.1} parent=1 // pred_region
      %v128 = vld [vmem:[#allocation2] sm:$0xff]
      %v129 = vld [vmem:[#allocation2 + $0x8] sm:$0xff]
      %v130 = vld [vmem:[%s2] sm:$0x1]
      %v132 = vlaneseq
      %v133 = vshrl.u32 %v132, 7
      %v134 = vsub.s32 0, %v133
      %v135 = vrot.slane %v130, %v134
      %v137 = vadd.f32 %v128, %v135
      %v138 = vadd.f32 %v129, %v135
      %v139 = vpack.c.bf16 %v138, %v137
      %v141 = vunpack.c.l.b16 %v139
      %v142 = vunpack.c.h.b16 %v139
      %v143 = vpack.c.b16 %v141, %v141
      %v144 = vpack.c.b16 %v142, %v142
      %vm147 = vcmask 257024
      %148 = vst.msk [vmem:[#allocation8] sm:$0xf] %vm147, %v143
      %149 = vst.msk [vmem:[#allocation8 + $0x4] sm:$0xf] %vm147, %v144
    $region29: #{tpu_custom_call.1} parent=1 // pred_fallthru
      _
    // Predicated region
    $region30: #{tpu_custom_call.1} parent=1 // pred_check
      _
    $region31: #{tpu_custom_call.1} parent=1 // pred_check_branch
      %151 = sbr.rel (0) target = $region33
    $region32: #{tpu_custom_call.1} parent=1 // pred_region
      %s153 = ssub.s32 128, 128
      %154 = vsyncadd [#allocation5], %s153
      %s155 = sshll.u32 [#allocation8], 4
      %s156 = int_to_ptr.vmem [resolvable:$true] %s155
      %161 = dma.vmem_to_hbm [thread:$0]  %s156, 128, %s3, [#allocation5], 64, 64, 4
    $region33: #{tpu_custom_call.1} parent=1 // pred_fallthru
      _
    // Predicated region
    $region34: #{tpu_custom_call.1} parent=1 // pred_check
      _
    $region35: #{tpu_custom_call.1} parent=1 // pred_check_branch
      %163 = sbr.rel (0) target = $region37
    $region36: #{tpu_custom_call.1} parent=1 // pred_region
      %164 = dma.done [#allocation5], 128
    $region37: #{tpu_custom_call.1} parent=1 // pred_fallthru
      _
    %165 = vsyncpa [#allocation4], 1
    %166 = vsyncpa [#allocation7], 1
    %167 = vsyncpa [#allocation5], 1

</llo_original>
